<compile_context>
chip_gen: v5e
topology: v5e:2x2
jax: 0.10.0
libtpu: 0.0.40
codegen_flags: <defaults>
</compile_context>

<pallas_src>
import jax
import jax.numpy as jnp
from jax import lax
from jax.experimental import pallas as pl
from jax.experimental.pallas import tpu as pltpu


def _round_up(x, m):
    return (x + m - 1) // m * m


def conv_bn_act_kernel(p_ref, w_ref, shift_ref, o_ref):
    # (TM, K) @ (K, Cout_pad) on the MXU, f32 accumulation.
    acc = jnp.dot(p_ref[...], w_ref[...], preferred_element_type=jnp.float32)
    # BN scale is pre-folded into the weights; epilogue = shift add + ReLU.
    y = acc + shift_ref[...]
    o_ref[...] = jnp.maximum(y, 0.0).astype(o_ref.dtype)


def _im2col_nhwc(x_nhwc, kh, kw, stride, padding):
    """Extract conv patches; feature ordering is (kh, kw, cin)."""
    N, H, W, C = x_nhwc.shape
    ph, pw = padding
    sh, sw = stride
    xp = jnp.pad(x_nhwc, ((0, 0), (ph, ph), (pw, pw), (0, 0)))
    Ho = (H + 2 * ph - kh) // sh + 1
    Wo = (W + 2 * pw - kw) // sw + 1
    cols = []
    for i in range(kh):
        for j in range(kw):
            patch = lax.slice(
                xp,
                (0, i, j, 0),
                (N, i + sh * (Ho - 1) + 1, j + sw * (Wo - 1) + 1, C),
                (1, sh, sw, 1),
            )  # (N, Ho, Wo, C)
            cols.append(patch)
    patches = jnp.concatenate(cols, axis=-1)  # (N, Ho, Wo, KH*KW*C)
    return patches.reshape(N * Ho * Wo, kh * kw * C), (N, Ho, Wo)


def conv_bn_act(x_nchw, conv_w, conv_b, gamma, beta, running_mean, running_var,
                *, eps=1e-5, stride=(1, 1), padding=(1, 1), block_m=512,
                compute_dtype=jnp.bfloat16):
    Cout, Cin, KH, KW = conv_w.shape
    out_dtype = x_nchw.dtype

    # NHWC + low-precision MXU input dtype (halves HBM bytes of the patches).
    # TODO(synk): keep activations NHWC end-to-end to avoid these transposes.
    x_nhwc = jnp.transpose(x_nchw, (0, 2, 3, 1)).astype(compute_dtype)
    patches, (N, Ho, Wo) = _im2col_nhwc(x_nhwc, KH, KW, stride, padding)

    # Fold conv bias + eval-mode BatchNorm:
    #   ((x*w + b) - mean) * scale + beta == x*(w*scale) + ((b - mean)*scale + beta)
    scale = gamma / jnp.sqrt(running_var + eps)        # (Cout,) f32
    shift = (conv_b - running_mean) * scale + beta     # (Cout,) f32

    # PyTorch weight (Cout, Cin, KH, KW) -> (KH, KW, Cin, Cout) -> 2D, matching
    # the (kh, kw, cin) patch ordering; fold the BN scale in (in f32), then
    # cast to the MXU input dtype.
    w2d = jnp.transpose(conv_w, (2, 3, 1, 0)).reshape(KH * KW * Cin, Cout)
    w2d = w2d * scale[None, :]

    # Lane-dense output: pad Cout up to a multiple of 128.
    Cout_pad = _round_up(Cout, 128)
    w2d = jnp.pad(w2d, ((0, 0), (0, Cout_pad - Cout))).astype(compute_dtype)
    shift_p = jnp.pad(shift, (0, Cout_pad - Cout)).reshape(1, Cout_pad)
    shift_p = shift_p.astype(jnp.float32)

    M, K = patches.shape
    # Row tile: multiple of 8 sublanes; pad M so the grid divides evenly
    # (zero rows are harmless and sliced away below).
    tm = _round_up(min(block_m, _round_up(M, 8)), 8)
    M_pad = _round_up(M, tm)
    if M_pad != M:
        patches = jnp.pad(patches, ((0, M_pad - M), (0, 0)))
    grid_m = M_pad // tm

    out2d = pl.pallas_call(
        conv_bn_act_kernel,
        out_shape=jax.ShapeDtypeStruct((M_pad, Cout_pad), out_dtype),
        grid=(grid_m,),
        in_specs=[
            pl.BlockSpec((tm, K), lambda i: (i, 0)),           # patches tile
            pl.BlockSpec((K, Cout_pad), lambda i: (0, 0)),     # weights (resident)
            pl.BlockSpec((1, Cout_pad), lambda i: (0, 0)),     # BN shift (resident)
        ],
        out_specs=pl.BlockSpec((tm, Cout_pad), lambda i: (i, 0)),
        compiler_params=pltpu.CompilerParams(
            dimension_semantics=("parallel",),     # shard row tiles across TCs (v7x)
            vmem_limit_bytes=32 * 1024 * 1024),
    )(patches, w2d, shift_p)

    out_nhwc = out2d[:M, :Cout].reshape(N, Ho, Wo, Cout)
    return jnp.transpose(out_nhwc, (0, 3, 1, 2))  # back to NCHW


def _reference(x, conv_w, conv_b, gamma, beta, rmean, rvar, eps=1e-5):
    y = lax.conv_general_dilated(
        x, conv_w, window_strides=(1, 1), padding=((1, 1), (1, 1)),
        dimension_numbers=("NCHW", "OIHW", "NCHW"))
    y = y + conv_b[None, :, None, None]
    s = (gamma / jnp.sqrt(rvar + eps))[None, :, None, None]
    y = (y - rmean[None, :, None, None]) * s + beta[None, :, None, None]
    return jnp.maximum(y, 0.0)


if __name__ == "__main__":
    key = jax.random.PRNGKey(0)
    k = jax.random.split(key, 7)

    N, Cin, H, W = 2, 4, 16, 16
    Cout, KH, KW = 8, 3, 3

    x = jax.random.normal(k[0], (N, Cin, H, W), dtype=jnp.float32)
    conv_w = 0.1 * jax.random.normal(k[1], (Cout, Cin, KH, KW), dtype=jnp.float32)
    conv_b = 0.1 * jax.random.normal(k[2], (Cout,), dtype=jnp.float32)
    gamma = 1.0 + 0.1 * jax.random.normal(k[3], (Cout,), dtype=jnp.float32)
    beta = 0.1 * jax.random.normal(k[4], (Cout,), dtype=jnp.float32)
    running_mean = 0.1 * jax.random.normal(k[5], (Cout,), dtype=jnp.float32)
    running_var = 0.5 + jnp.abs(jax.random.normal(k[6], (Cout,), dtype=jnp.float32))

    # block_m=256 -> M=512 splits into 2 row tiles, exercising the pipelined grid.
    out = conv_bn_act(x, conv_w, conv_b, gamma, beta, running_mean, running_var,
                      block_m=256)
    out = jax.block_until_ready(out)

    ref = _reference(x, conv_w, conv_b, gamma, beta, running_mean, running_var)
    assert out.shape == (N, Cout, H, W), out.shape
    # bf16 MXU inputs (f32 accumulation) -> loosened tolerance vs the f32 reference.
    max_err = float(jnp.max(jnp.abs(out - ref)))
    assert jnp.allclose(out, ref, atol=5e-2, rtol=5e-2), max_err

    print("KERNEL_OK")
</pallas_src>

<mosaic_0001>
module attributes {stable_mosaic.version = 11 : i64} {
  func.func @conv_bn_act_kernel(%arg0: i32, %arg1: memref<256x36xbf16, #tpu.memory_space<vmem>>, %arg2: memref<36x128xbf16, #tpu.memory_space<vmem>>, %arg3: memref<1x128xf32, #tpu.memory_space<vmem>>, %arg4: memref<256x128xf32, #tpu.memory_space<vmem>>) attributes {dimension_semantics = [#tpu.dimension_semantics<parallel>], iteration_bounds = array<i64: 2>, scalar_prefetch = 0 : i64, scratch_operands = 0 : i64, tpu.core_type = #tpu.core_type<tc>, window_params = [{transform_indices = @transform_0, window_bounds = array<i64: 256, 36>}, {pipeline_mode = #tpu.pipeline_mode<synchronous>, transform_indices = @transform_1, window_bounds = array<i64: 36, 128>}, {pipeline_mode = #tpu.pipeline_mode<synchronous>, transform_indices = @transform_2, window_bounds = array<i64: 1, 128>}, {transform_indices = @transform_3, window_bounds = array<i64: 256, 128>}]} {
    %c0 = arith.constant 0 : index
    %c0_0 = arith.constant 0 : index
    %0 = vector.load %arg1[%c0, %c0_0] : memref<256x36xbf16, #tpu.memory_space<vmem>>, vector<256x36xbf16>
    %c0_1 = arith.constant 0 : index
    %c0_2 = arith.constant 0 : index
    %1 = vector.load %arg2[%c0_1, %c0_2] : memref<36x128xbf16, #tpu.memory_space<vmem>>, vector<36x128xbf16>
    %cst = arith.constant dense<0.000000e+00> : vector<256x128xf32>
    %2 = tpu.matmul %0, %1, %cst {dimension_numbers = #tpu.dot_dimension_numbers<[1], [0], [0], [1], [0, 0, 1, 1], [], []>} : vector<256x36xbf16>, vector<36x128xbf16>, vector<256x128xf32> -> vector<256x128xf32>
    %c0_3 = arith.constant 0 : index
    %c0_4 = arith.constant 0 : index
    %3 = vector.load %arg3[%c0_3, %c0_4] : memref<1x128xf32, #tpu.memory_space<vmem>>, vector<1x128xf32>
    %4 = vector.broadcast %3 : vector<1x128xf32> to vector<256x128xf32>
    %5 = arith.addf %2, %4 : vector<256x128xf32>
    %cst_5 = arith.constant 0.000000e+00 : f32
    %6 = vector.broadcast %cst_5 : f32 to vector<256x128xf32>
    %7 = arith.maximumf %5, %6 : vector<256x128xf32>
    %c0_6 = arith.constant 0 : index
    %c0_7 = arith.constant 0 : index
    %8 = vector.load %arg4[%c0_6, %c0_7] : memref<256x128xf32, #tpu.memory_space<vmem>>, vector<256x128xf32>
    tpu.vector_store %arg4[%c0_6, %c0_7], %7 {strides = array<i32>} : memref<256x128xf32, #tpu.memory_space<vmem>>, vector<256x128xf32>,
    return
  }
  func.func @transform_0(%arg0: i32) -> (i32, i32) {
    %c0_i32 = arith.constant 0 : i32
    %c0_i32_0 = arith.constant 0 : i32
    return %arg0, %c0_i32 : i32, i32
  }
  func.func @transform_1(%arg0: i32) -> (i32, i32) {
    %c0_i32 = arith.constant 0 : i32
    %c0_i32_0 = arith.constant 0 : i32
    %c0_i32_1 = arith.constant 0 : i32
    return %c0_i32, %c0_i32_0 : i32, i32
  }
  func.func @transform_2(%arg0: i32) -> (i32, i32) {
    %c0_i32 = arith.constant 0 : i32
    %c0_i32_0 = arith.constant 0 : i32
    %c0_i32_1 = arith.constant 0 : i32
    return %c0_i32, %c0_i32_0 : i32, i32
  }
  func.func @transform_3(%arg0: i32) -> (i32, i32) {
    %c0_i32 = arith.constant 0 : i32
    %c0_i32_0 = arith.constant 0 : i32
    return %arg0, %c0_i32 : i32, i32
  }
}

</mosaic_0001>

<llo_original>
// kernel: tpu_custom_call.1
$region0: #{tpu_custom_call.1}
  #allocation0 [shape = 'u32[]', space=smem, size = 0x4, offset = 0x4, fixed_abs, tag = 'smem constant byte address 0x4 - core index']
  #allocation1 [shape = 'u32[72,128]{1,0:T(1,128)}', space=vmem, size = 0x9000, scoped, tag = 'internal scratch']
  %s0 = inlined_call_operand.vmem [shape: bf16[512,36], index: 0, kind: input, shape index: {}]
  %s1 = inlined_call_operand.vmem [shape: bf16[36,128], index: 1, kind: input, shape index: {}]
  %s2 = inlined_call_operand.vmem [shape: f32[1,128], index: 2, kind: input, shape index: {}]
  %s3 = inlined_call_operand.hbm [shape: f32[512,128], index: 3, kind: output, shape index: {}]
  %s4 = sld [smem:[#allocation0]]
  $region45: #{tpu_custom_call.1} parent=0
    _
  %s6 = ssub.s32 1, %s4
  %s7 = scalar_select 0, %s6, %s4
  $region1: #{tpu_custom_call.1} parent=0
    #allocation2 [shape = 'u8[262144]{0}', space=vmem, size = 0x40000, scoped, tag = 'output window, operand 0']
    #allocation3 [shape = 's32[2]{0}', space=sflag, size = 0x8, scoped, tag = 'scoped memory for tpu_custom_call.1']
    %8 = vsyncpa [#allocation3], 0
    %s9 = scalar_lea.sflag [#allocation3], 1
    %10 = vsyncpa %s9, 0
    loop: start=0, step=1, limit=4
    $region2: #{tpu_custom_call.1} parent=1 // loop_pre_header
      _
    $region3: #{tpu_custom_call.1} parent=1 // loop_header
      %s12 = sphi 0, %s16
      %p13 = scmp.ge.s32.totalorder %s12, 4
      %s22 = sphi 0, %s24
      %s25 = sphi 0, %s22
      %s26 = sphi 0, %s25
      %s42 = sphi 0, %s26
      %s46 = sphi 0, %s46
      %s48 = sphi 0, %s46
      %s49 = sphi 0, %s48
      %s63 = sphi 0, %s49
      %s67 = sphi 0, %s67
      %s69 = sphi 0, %s67
      %s70 = sphi 0, %s69
      %s84 = sphi 0, %s70
      %s90 = sphi 0, %s92
      %s93 = sphi 0, %s90
      %s94 = sphi 0, %s93
      %s110 = sphi 0, %s94
    $region4: #{tpu_custom_call.1} parent=1 // loop_header_branch
      %15 = sbr.rel (%p13) target = $region8
    $region5: #{tpu_custom_call.1} parent=1 // loop_body
      %s17 = ssub.s32 %s12, 1
      %s18 = ssub.s32 %s12, 2
      %s19 = sadd.s32 %s12, 1
      %s20 = ssub.s32 %s12, %s19
      %p21 = scmp.eq.s32.totalorder %s20, 0
      %s23 = sadd.s32 %s22, 1
      %s24 = scalar_select %p21, %s22, %s23
      %p27 = pneg %p21
      %p28 = scmp.eq.s32.totalorder %s12, 1
      %p29 = por %p27, %p28
      %p30 = scmp.ne.s32.totalorder %s22, %s25
      %p31 = scmp.eq.s32.totalorder %s12, 0
      %p32 = por %p30, %p31
      %p33 = scmp.ne.s32.totalorder %s22, %s25
      %p34 = scmp.eq.s32.totalorder %s17, 1
      %p35 = por %p33, %p34
      %p36 = scmp.ne.s32.totalorder %s25, %s26
      %p37 = scmp.eq.s32.totalorder %s17, 0
      %p38 = por %p36, %p37
      %p39 = scmp.ne.s32.totalorder %s25, %s26
      %p40 = scmp.eq.s32.totalorder %s18, 1
      %p41 = por %p39, %p40
      %p43 = scmp.ne.s32.totalorder %s26, %s42
      %p44 = scmp.eq.s32.totalorder %s18, 0
      %p45 = por %p43, %p44
      %s47 = sadd.s32 %s46, 1
      %p50 = scmp.eq.s32.totalorder %s12, 1
      %p51 = scmp.ne.s32.totalorder %s46, %s48
      %p52 = scmp.eq.s32.totalorder %s12, 0
      %p53 = por %p51, %p52
      %p54 = scmp.ne.s32.totalorder %s46, %s48
      %p55 = scmp.eq.s32.totalorder %s17, 1
      %p56 = por %p54, %p55
      %p57 = scmp.ne.s32.totalorder %s48, %s49
      %p58 = scmp.eq.s32.totalorder %s17, 0
      %p59 = por %p57, %p58
      %p60 = scmp.ne.s32.totalorder %s48, %s49
      %p61 = scmp.eq.s32.totalorder %s18, 1
      %p62 = por %p60, %p61
      %p64 = scmp.ne.s32.totalorder %s49, %s63
      %p65 = scmp.eq.s32.totalorder %s18, 0
      %p66 = por %p64, %p65
      %s68 = sadd.s32 %s67, 1
      %p71 = scmp.eq.s32.totalorder %s12, 1
      %p72 = scmp.ne.s32.totalorder %s67, %s69
      %p73 = scmp.eq.s32.totalorder %s12, 0
      %p74 = por %p72, %p73
      %p75 = scmp.ne.s32.totalorder %s67, %s69
      %p76 = scmp.eq.s32.totalorder %s17, 1
      %p77 = por %p75, %p76
      %p78 = scmp.ne.s32.totalorder %s69, %s70
      %p79 = scmp.eq.s32.totalorder %s17, 0
      %p80 = por %p78, %p79
      %p81 = scmp.ne.s32.totalorder %s69, %s70
      %p82 = scmp.eq.s32.totalorder %s18, 1
      %p83 = por %p81, %p82
      %p85 = scmp.ne.s32.totalorder %s70, %s84
      %p86 = scmp.eq.s32.totalorder %s18, 0
      %p87 = por %p85, %p86
      %s88 = ssub.s32 %s12, %s19
      %p89 = scmp.eq.s32.totalorder %s88, 0
      %s91 = sadd.s32 %s90, 1
      %s92 = scalar_select %p89, %s90, %s91
      %p95 = pneg %p89
      %p96 = scmp.eq.s32.totalorder %s12, 1
      %p97 = por %p95, %p96
      %p98 = scmp.ne.s32.totalorder %s90, %s93
      %p99 = scmp.eq.s32.totalorder %s12, 0
      %p100 = por %p98, %p99
      %p101 = scmp.ne.s32.totalorder %s90, %s93
      %p102 = scmp.eq.s32.totalorder %s17, 1
      %p103 = por %p101, %p102
      %p104 = scmp.ne.s32.totalorder %s93, %s94
      %p105 = scmp.eq.s32.totalorder %s17, 0
      %p106 = por %p104, %p105
      %p107 = scmp.ne.s32.totalorder %s93, %s94
      %p108 = scmp.eq.s32.totalorder %s18, 1
      %p109 = por %p107, %p108
      %p111 = scmp.ne.s32.totalorder %s94, %s110
      %p112 = scmp.eq.s32.totalorder %s18, 0
      %p113 = por %p111, %p112
      %p114 = scmp.le.s32.totalorder 1, %s12
      %p115 = scmp.lt.s32.totalorder %s12, 3
      %p116 = pnand %p114, %p115
      %p117 = pneg %p116
      // Predicated region
      $region9: #{tpu_custom_call.1} parent=5 // pred_check
        _
      $region10: #{tpu_custom_call.1} parent=5 // pred_check_branch
        %119 = sbr.rel (%p116) target = $region12
      $region11: #{tpu_custom_call.1} parent=5 // pred_region
        %s120 = ssub.s32 %s12, 1
        // Predicated region
        $region13: #{tpu_custom_call.1} parent=11 // pred_check
          %p121 = pneg %p59
        $region14: #{tpu_custom_call.1} parent=11 // pred_check_branch
          %123 = sbr.rel (%p121) target = $region16
        $region15: #{tpu_custom_call.1} parent=11 // pred_region
          _
        $region16: #{tpu_custom_call.1} parent=11 // pred_fallthru
          _
        // Predicated region
        $region17: #{tpu_custom_call.1} parent=11 // pred_check
          %p124 = pneg %p80
        $region18: #{tpu_custom_call.1} parent=11 // pred_check_branch
          %126 = sbr.rel (%p124) target = $region20
        $region19: #{tpu_custom_call.1} parent=11 // pred_region
          _
        $region20: #{tpu_custom_call.1} parent=11 // pred_fallthru
          _
      $region12: #{tpu_custom_call.1} parent=5 // pred_fallthru
        _
      %p127 = scmp.lt.s32.totalorder %s12, 2
      // Predicated region
      $region21: #{tpu_custom_call.1} parent=5 // pred_check
        %p128 = pneg %p127
      $region22: #{tpu_custom_call.1} parent=5 // pred_check_branch
        %130 = sbr.rel (%p128) target = $region24
      $region23: #{tpu_custom_call.1} parent=5 // pred_region
        // Predicated region
        $region25: #{tpu_custom_call.1} parent=23 // pred_check
          %p131 = pneg %p32
        $region26: #{tpu_custom_call.1} parent=23 // pred_check_branch
          %133 = sbr.rel (%p131) target = $region28
        $region27: #{tpu_custom_call.1} parent=23 // pred_region
          %s134 = smul.u32 32, %s12
          %p135 = scmp.lt.s32.totalorder %s134, 63
          %s136 = scalar_select %p135, %s134, 63
          %s137 = smul.addr %s136, 4
          %s138 = scalar_lea.vmem %s0, %s137
          %s139 = smul.u32 32, %s12
        $region28: #{tpu_custom_call.1} parent=23 // pred_fallthru
          _
      $region24: #{tpu_custom_call.1} parent=5 // pred_fallthru
        _
      %p140 = scmp.le.s32.totalorder 1, %s12
      %p141 = scmp.lt.s32.totalorder %s12, 3
      %p142 = pnand %p140, %p141
      %p143 = pneg %p142
      // Predicated region
      $region29: #{tpu_custom_call.1} parent=5 // pred_check
        _
      $region30: #{tpu_custom_call.1} parent=5 // pred_check_branch
        %145 = sbr.rel (%p142) target = $region32
      $region31: #{tpu_custom_call.1} parent=5 // pred_region
        %s146 = ssub.s32 %s12, 1
        %s147 = smul.u32 32, %s17
        %p148 = scmp.lt.s32.totalorder %s147, 63
        %s149 = scalar_select %p148, %s147, 63
        %s150 = smul.addr %s149, 4
        %s151 = scalar_lea.vmem %s0, %s150
        %p152 = pneg %p38
        %p153 = pneg %p35
        %p154 = pneg %p59
        %p155 = pneg %p56
        %p156 = pneg %p80
        %p157 = pneg %p77
        %p158 = pneg %p106
        %p159 = pneg %p103
        %s160 = sand.u32 %s93, 1
        %s161 = scalar_lea.sflag [#allocation3], %s160
        %s162 = sand.u32 %s93, 1
        %s163 = smul.addr %s162, 256
        %s164 = scalar_lea.vmem [#allocation2], %s163
        %s165 = smul.u32 32, %s17
        %p166 = scmp.lt.s32.totalorder %s165, 63
        %s167 = scalar_select %p166, %s165, 63
        %s168 = smul.addr %s167, 4
        %s169 = scalar_lea.vmem %s0, %s168
        %s170 = smul.u32 32, %s17
        %s171 = smul.u32 32, %s17
        %v173 = vld [vmem:[%s169] sm:$0xf]
        %v174 = vld [vmem:[%s169 + $0x4] sm:$0xf]
        %v175 = vld [vmem:[%s169 + $0x8] sm:$0xf]
        %v176 = vld [vmem:[%s169 + $0xc] sm:$0xf]
        %v177 = vld [vmem:[%s169 + $0x10] sm:$0xf]
        %v178 = vld [vmem:[%s169 + $0x14] sm:$0xf]
        %v179 = vld [vmem:[%s169 + $0x18] sm:$0xf]
        %v180 = vld [vmem:[%s169 + $0x1c] sm:$0xf]
        %v181 = vld [vmem:[%s169 + $0x20] sm:$0xf]
        %v182 = vld [vmem:[%s169 + $0x24] sm:$0xf]
        %v183 = vld [vmem:[%s169 + $0x28] sm:$0xf]
        %v184 = vld [vmem:[%s169 + $0x2c] sm:$0xf]
        %v185 = vld [vmem:[%s169 + $0x30] sm:$0xf]
        %v186 = vld [vmem:[%s169 + $0x34] sm:$0xf]
        %v187 = vld [vmem:[%s169 + $0x38] sm:$0xf]
        %v188 = vld [vmem:[%s169 + $0x3c] sm:$0xf]
        %v189 = vld [vmem:[%s169 + $0x40] sm:$0xf]
        %v190 = vld [vmem:[%s169 + $0x44] sm:$0xf]
        %v191 = vld [vmem:[%s169 + $0x48] sm:$0xf]
        %v192 = vld [vmem:[%s169 + $0x4c] sm:$0xf]
        %v193 = vld [vmem:[%s169 + $0x50] sm:$0xf]
        %v194 = vld [vmem:[%s169 + $0x54] sm:$0xf]
        %v195 = vld [vmem:[%s169 + $0x58] sm:$0xf]
        %v196 = vld [vmem:[%s169 + $0x5c] sm:$0xf]
        %v197 = vld [vmem:[%s169 + $0x60] sm:$0xf]
        %v198 = vld [vmem:[%s169 + $0x64] sm:$0xf]
        %v199 = vld [vmem:[%s169 + $0x68] sm:$0xf]
        %v200 = vld [vmem:[%s169 + $0x6c] sm:$0xf]
        %v201 = vld [vmem:[%s169 + $0x70] sm:$0xf]
        %v202 = vld [vmem:[%s169 + $0x74] sm:$0xf]
        %v203 = vld [vmem:[%s169 + $0x78] sm:$0xf]
        %v204 = vld [vmem:[%s169 + $0x7c] sm:$0xf]
        %v205 = vld [vmem:[%s1] sm:$0xf]
        %v206 = vld [vmem:[%s1 + $0x4] sm:$0xf]
        %v207 = vld [vmem:[%s1 + $0x8] sm:$0xf]
        %v208 = vld [vmem:[%s1 + $0xc] sm:$0xf]
        %v209 = vld [vmem:[%s1 + $0x10] sm:$0x3]
        %v210 = vld [vmem:[%s2] sm:$0x1]
        %v212 = vperm.slane %v210, 0
        %v246 = vunpack.c.l.b16 %v173
        %v247 = vunpack.c.l.b16 %v174
        %v248 = vunpack.c.l.b16 %v175
        %v249 = vunpack.c.l.b16 %v176
        %v250 = vunpack.c.l.b16 %v177
        %v251 = vunpack.c.l.b16 %v178
        %v252 = vunpack.c.l.b16 %v179
        %v253 = vunpack.c.l.b16 %v180
        %v254 = vunpack.c.l.b16 %v181
        %v255 = vunpack.c.l.b16 %v182
        %v256 = vunpack.c.l.b16 %v183
        %v257 = vunpack.c.l.b16 %v184
        %v258 = vunpack.c.l.b16 %v185
        %v259 = vunpack.c.l.b16 %v186
        %v260 = vunpack.c.l.b16 %v187
        %v261 = vunpack.c.l.b16 %v188
        %v262 = vunpack.c.l.b16 %v189
        %v263 = vunpack.c.l.b16 %v190
        %v264 = vunpack.c.l.b16 %v191
        %v265 = vunpack.c.l.b16 %v192
        %v266 = vunpack.c.l.b16 %v193
        %v267 = vunpack.c.l.b16 %v194
        %v268 = vunpack.c.l.b16 %v195
        %v269 = vunpack.c.l.b16 %v196
        %v270 = vunpack.c.l.b16 %v197
        %v271 = vunpack.c.l.b16 %v198
        %v272 = vunpack.c.l.b16 %v199
        %v273 = vunpack.c.l.b16 %v200
        %v274 = vunpack.c.l.b16 %v201
        %v275 = vunpack.c.l.b16 %v202
        %v276 = vunpack.c.l.b16 %v203
        %v277 = vunpack.c.l.b16 %v204
        %v278 = vpack.c.b16 %v247, %v246
        %v279 = vpack.c.b16 %v249, %v248
        %v280 = vpack.c.b16 %v251, %v250
        %v281 = vpack.c.b16 %v253, %v252
        %v282 = vpack.c.b16 %v255, %v254
        %v283 = vpack.c.b16 %v257, %v256
        %v284 = vpack.c.b16 %v259, %v258
        %v285 = vpack.c.b16 %v261, %v260
        %v286 = vpack.c.b16 %v263, %v262
        %v287 = vpack.c.b16 %v265, %v264
        %v288 = vpack.c.b16 %v267, %v266
        %v289 = vpack.c.b16 %v269, %v268
        %v290 = vpack.c.b16 %v271, %v270
        %v291 = vpack.c.b16 %v273, %v272
        %v292 = vpack.c.b16 %v275, %v274
        %v293 = vpack.c.b16 %v277, %v276
        %v299 = vunpack.c.l.b16 %v205
        %v300 = vunpack.c.l.b16 %v206
        %v301 = vunpack.c.l.b16 %v207
        %v302 = vunpack.c.l.b16 %v208
        %v303 = vunpack.c.l.b16 %v209
        %v304 = vpack.c.b16 %v300, %v299
        %v305 = vpack.c.b16 %v302, %v301
        %v306 = vpack.c.b16 %v303, %v303
        %vm309 = vcmask 293888
        %v311 = vsel %vm309, %v278, 0
        %v314 = vsel %vm309, %v279, 0
        %v317 = vsel %vm309, %v280, 0
        %v320 = vsel %vm309, %v281, 0
        %v323 = vsel %vm309, %v282, 0
        %v326 = vsel %vm309, %v283, 0
        %v329 = vsel %vm309, %v284, 0
        %v332 = vsel %vm309, %v285, 0
        %v335 = vsel %vm309, %v286, 0
        %v338 = vsel %vm309, %v287, 0
        %v341 = vsel %vm309, %v288, 0
        %v344 = vsel %vm309, %v289, 0
        %v347 = vsel %vm309, %v290, 0
        %v350 = vsel %vm309, %v291, 0
        %v353 = vsel %vm309, %v292, 0
        %v356 = vsel %vm309, %v293, 0
        %vm358 = vcmask 1041408
        %v360 = vsel %vm358, %v306, 0
        %362 = vmatpush.bf16.msra.mxu0 0
        %363 = vmatpush.bf16.msra.mxu0 0
        %364 = vmatpush.bf16.msra.mxu0 0
        %365 = vmatpush.bf16.msra.mxu0 0
        %366 = vmatpush.bf16.msra.mxu0 0
        %367 = vmatpush.bf16.msra.mxu0 %v360
        %368 = vmatpush.bf16.msra.mxu0 %v305
        %369 = vmatpush.bf16.msra.mxu0 %v304
        %370 = vmatmul.bf16.gmra.mxu0 %v311
        %v371 = vpop.f32.mrf.mxu0
        %v372 = vadd.f32 %v212, %v371
        %v373 = vpop.f32.mrf.mxu0
        %v374 = vadd.f32 %v212, %v373
        %375 = vmatmul.bf16.gmra.mxu0 %v314
        %v376 = vpop.f32.mrf.mxu0
        %v377 = vadd.f32 %v212, %v376
        %v378 = vpop.f32.mrf.mxu0
        %v379 = vadd.f32 %v212, %v378
        %380 = vmatmul.bf16.gmra.mxu0 %v317
        %v381 = vpop.f32.mrf.mxu0
        %v382 = vadd.f32 %v212, %v381
        %v383 = vpop.f32.mrf.mxu0
        %v384 = vadd.f32 %v212, %v383
        %385 = vmatmul.bf16.gmra.mxu0 %v320
        %v386 = vpop.f32.mrf.mxu0
        %v387 = vadd.f32 %v212, %v386
        %v388 = vpop.f32.mrf.mxu0
        %v389 = vadd.f32 %v212, %v388
        %390 = vmatmul.bf16.gmra.mxu0 %v323
        %v391 = vpop.f32.mrf.mxu0
        %v392 = vadd.f32 %v212, %v391
        %v393 = vpop.f32.mrf.mxu0
        %v394 = vadd.f32 %v212, %v393
        %395 = vmatmul.bf16.gmra.mxu0 %v326
        %v396 = vpop.f32.mrf.mxu0
        %v397 = vadd.f32 %v212, %v396
        %v398 = vpop.f32.mrf.mxu0
        %v399 = vadd.f32 %v212, %v398
        %400 = vmatmul.bf16.gmra.mxu0 %v329
        %v401 = vpop.f32.mrf.mxu0
        %v402 = vadd.f32 %v212, %v401
        %v403 = vpop.f32.mrf.mxu0
        %v404 = vadd.f32 %v212, %v403
        %405 = vmatmul.bf16.gmra.mxu0 %v332
        %v406 = vpop.f32.mrf.mxu0
        %v407 = vadd.f32 %v212, %v406
        %v408 = vpop.f32.mrf.mxu0
        %v409 = vadd.f32 %v212, %v408
        %410 = vmatmul.bf16.gmra.mxu0 %v335
        %v411 = vpop.f32.mrf.mxu0
        %v412 = vadd.f32 %v212, %v411
        %v413 = vpop.f32.mrf.mxu0
        %v414 = vadd.f32 %v212, %v413
        %415 = vmatmul.bf16.gmra.mxu0 %v338
        %v416 = vpop.f32.mrf.mxu0
        %v417 = vadd.f32 %v212, %v416
        %v418 = vpop.f32.mrf.mxu0
        %v419 = vadd.f32 %v212, %v418
        %420 = vmatmul.bf16.gmra.mxu0 %v341
        %v421 = vpop.f32.mrf.mxu0
        %v422 = vadd.f32 %v212, %v421
        %v423 = vpop.f32.mrf.mxu0
        %v424 = vadd.f32 %v212, %v423
        %425 = vmatmul.bf16.gmra.mxu0 %v344
        %v426 = vpop.f32.mrf.mxu0
        %v427 = vadd.f32 %v212, %v426
        %v428 = vpop.f32.mrf.mxu0
        %v429 = vadd.f32 %v212, %v428
        %430 = vmatmul.bf16.gmra.mxu0 %v347
        %v431 = vpop.f32.mrf.mxu0
        %v432 = vadd.f32 %v212, %v431
        %v433 = vpop.f32.mrf.mxu0
        %v434 = vadd.f32 %v212, %v433
        %435 = vmatmul.bf16.gmra.mxu0 %v350
        %v436 = vpop.f32.mrf.mxu0
        %v437 = vadd.f32 %v212, %v436
        %v438 = vpop.f32.mrf.mxu0
        %v439 = vadd.f32 %v212, %v438
        %440 = vmatmul.bf16.gmra.mxu0 %v353
        %v441 = vpop.f32.mrf.mxu0
        %v442 = vadd.f32 %v212, %v441
        %v443 = vpop.f32.mrf.mxu0
        %v444 = vadd.f32 %v212, %v443
        %445 = vmatmul.bf16.gmra.mxu0 %v356
        %v446 = vpop.f32.mrf.mxu0
        %v447 = vadd.f32 %v212, %v446
        %v448 = vpop.f32.mrf.mxu0
        %v449 = vadd.f32 %v212, %v448
        %450 = vdwg.mxu0
        %v451 = vmax.f32 %v372, 0.0
        %v452 = vmax.f32 %v374, 0.0
        %v453 = vmax.f32 %v377, 0.0
        %v454 = vmax.f32 %v379, 0.0
        %v455 = vmax.f32 %v382, 0.0
        %v456 = vmax.f32 %v384, 0.0
        %v457 = vmax.f32 %v387, 0.0
        %v458 = vmax.f32 %v389, 0.0
        %v459 = vmax.f32 %v392, 0.0
        %v460 = vmax.f32 %v394, 0.0
        %v461 = vmax.f32 %v397, 0.0
        %v462 = vmax.f32 %v399, 0.0
        %v463 = vmax.f32 %v402, 0.0
        %v464 = vmax.f32 %v404, 0.0
        %v465 = vmax.f32 %v407, 0.0
        %v466 = vmax.f32 %v409, 0.0
        %v467 = vmax.f32 %v412, 0.0
        %v468 = vmax.f32 %v414, 0.0
        %v469 = vmax.f32 %v417, 0.0
        %v470 = vmax.f32 %v419, 0.0
        %v471 = vmax.f32 %v422, 0.0
        %v472 = vmax.f32 %v424, 0.0
        %v473 = vmax.f32 %v427, 0.0
        %v474 = vmax.f32 %v429, 0.0
        %v475 = vmax.f32 %v432, 0.0
        %v476 = vmax.f32 %v434, 0.0
        %v477 = vmax.f32 %v437, 0.0
        %v478 = vmax.f32 %v439, 0.0
        %v479 = vmax.f32 %v442, 0.0
        %v480 = vmax.f32 %v444, 0.0
        %v481 = vmax.f32 %v447, 0.0
        %v482 = vmax.f32 %v449, 0.0
        %483 = vst [vmem:[%s164] sm:$0xff] %v451
        %484 = vst [vmem:[%s164 + $0x8] sm:$0xff] %v452
        %485 = vst [vmem:[%s164 + $0x10] sm:$0xff] %v453
        %486 = vst [vmem:[%s164 + $0x18] sm:$0xff] %v454
        %487 = vst [vmem:[%s164 + $0x20] sm:$0xff] %v455
        %488 = vst [vmem:[%s164 + $0x28] sm:$0xff] %v456
        %489 = vst [vmem:[%s164 + $0x30] sm:$0xff] %v457
        %490 = vst [vmem:[%s164 + $0x38] sm:$0xff] %v458
        %491 = vst [vmem:[%s164 + $0x40] sm:$0xff] %v459
        %492 = vst [vmem:[%s164 + $0x48] sm:$0xff] %v460
        %493 = vst [vmem:[%s164 + $0x50] sm:$0xff] %v461
        %494 = vst [vmem:[%s164 + $0x58] sm:$0xff] %v462
        %495 = vst [vmem:[%s164 + $0x60] sm:$0xff] %v463
        %496 = vst [vmem:[%s164 + $0x68] sm:$0xff] %v464
        %497 = vst [vmem:[%s164 + $0x70] sm:$0xff] %v465
        %498 = vst [vmem:[%s164 + $0x78] sm:$0xff] %v466
        %499 = vst [vmem:[%s164 + $0x80] sm:$0xff] %v467
        %500 = vst [vmem:[%s164 + $0x88] sm:$0xff] %v468
        %501 = vst [vmem:[%s164 + $0x90] sm:$0xff] %v469
        %502 = vst [vmem:[%s164 + $0x98] sm:$0xff] %v470
        %503 = vst [vmem:[%s164 + $0xa0] sm:$0xff] %v471
        %504 = vst [vmem:[%s164 + $0xa8] sm:$0xff] %v472
        %505 = vst [vmem:[%s164 + $0xb0] sm:$0xff] %v473
        %506 = vst [vmem:[%s164 + $0xb8] sm:$0xff] %v474
        %507 = vst [vmem:[%s164 + $0xc0] sm:$0xff] %v475
        %508 = vst [vmem:[%s164 + $0xc8] sm:$0xff] %v476
        %509 = vst [vmem:[%s164 + $0xd0] sm:$0xff] %v477
        %510 = vst [vmem:[%s164 + $0xd8] sm:$0xff] %v478
        %511 = vst [vmem:[%s164 + $0xe0] sm:$0xff] %v479
        %512 = vst [vmem:[%s164 + $0xe8] sm:$0xff] %v480
        %513 = vst [vmem:[%s164 + $0xf0] sm:$0xff] %v481
        %514 = vst [vmem:[%s164 + $0xf8] sm:$0xff] %v482
        %s515 = sand.u32 %s93, 1
        %s516 = scalar_lea.sflag [#allocation3], %s515
        %s517 = sand.u32 %s93, 1
        %s518 = smul.addr %s517, 256
        %s519 = scalar_lea.vmem [#allocation2], %s518
        // Predicated region
        $region33: #{tpu_custom_call.1} parent=31 // pred_check
          %p520 = pneg %p103
        $region34: #{tpu_custom_call.1} parent=31 // pred_check_branch
          %522 = sbr.rel (%p520) target = $region36
        $region35: #{tpu_custom_call.1} parent=31 // pred_region
          %s523 = smul.u32 32, %s17
          %525 = vsyncadd %s516, 0
          %s526 = smul.addr %s523, 8
          %s527 = scalar_lea.hbm %s3, %s526
          %s528 = sshll.u32 %s519, 4
          %s529 = int_to_ptr.vmem [resolvable:$true] %s528
          %s530 = sshll.u32 %s527, 4
          %s531 = int_to_ptr.hbm [resolvable:$true] %s530
          %536 = dma.vmem_to_hbm [thread:$0]  %s529, 4096, %s531, %s516, 128, 128, 8
        $region36: #{tpu_custom_call.1} parent=31 // pred_fallthru
          _
      $region32: #{tpu_custom_call.1} parent=5 // pred_fallthru
        _
      %p537 = scmp.le.s32.totalorder 2, %s12
      // Predicated region
      $region37: #{tpu_custom_call.1} parent=5 // pred_check
        %p538 = pneg %p537
      $region38: #{tpu_custom_call.1} parent=5 // pred_check_branch
        %540 = sbr.rel (%p538) target = $region40
      $region39: #{tpu_custom_call.1} parent=5 // pred_region
        %s541 = ssub.s32 %s12, 2
        // Predicated region
        $region41: #{tpu_custom_call.1} parent=39 // pred_check
          %p542 = pneg %p109
        $region42: #{tpu_custom_call.1} parent=39 // pred_check_branch
          %544 = sbr.rel (%p542) target = $region44
        $region43: #{tpu_custom_call.1} parent=39 // pred_region
          %s545 = sand.u32 %s94, 1
          %s546 = scalar_lea.sflag [#allocation3], %s545
          %s547 = sand.u32 %s94, 1
          %s548 = smul.addr %s547, 256
          %s549 = scalar_lea.vmem [#allocation2], %s548
          %551 = dma.done %s546, 4096
        $region44: #{tpu_custom_call.1} parent=39 // pred_fallthru
          _
      $region40: #{tpu_custom_call.1} parent=5 // pred_fallthru
        _
    $region6: #{tpu_custom_call.1} parent=1 // loop_footer
      %s16 = sadd.s32 1, %s12
    $region7: #{tpu_custom_call.1} parent=1 // loop_footer_branch
      %11 = sbr.rel target = $region3
    $region8: #{tpu_custom_call.1} parent=1 // loop_exit
      _
    %552 = vsyncpa [#allocation3], 1
    %s553 = scalar_lea.sflag [#allocation3], 1
    %554 = vsyncpa %s553, 1

</llo_original>
